<compile_context>
chip_gen: v6e
topology: v6e:2x2x1
jax: 0.10.0
libtpu: 0.0.40
codegen_flags: <defaults>
</compile_context>

<pallas_src>
import functools

import jax
import jax.numpy as jnp
from jax.experimental import pallas as pl
from jax.experimental.pallas import tpu as pltpu


def _round_up(x, m):
    return ((x + m - 1) // m) * m


def _tensorcores_per_chip():
    """2 TensorCores per chip on v7x; 1 on v5e/v6e.  Safe fallback = 1."""
    try:
        kind = jax.devices()[0].device_kind.lower()
    except Exception:
        return 1
    if "v7" in kind or "7x" in kind:
        return 2
    return 1


def categorical_policy_kernel(x_ref,
                              w1_ref, b1_ref,
                              w2_ref, b2_ref,
                              w3_ref, b3_ref,
                              logp_ref):
    """One batch tile of the MLP + Categorical log-softmax, fully fused."""
    mm_dtype = w1_ref.dtype
    x = x_ref[...].astype(mm_dtype)                              # (TB, 16) bf16

    # Layer 1: Linear + Tanh (f32 accumulate, f32 epilogue)
    h1 = jnp.dot(x, w1_ref[...], preferred_element_type=jnp.float32)
    h1 = jnp.tanh(h1 + b1_ref[...])                              # (TB, 32) f32

    # Layer 2: Linear + Tanh
    h2 = jnp.dot(h1.astype(mm_dtype), w2_ref[...],
                 preferred_element_type=jnp.float32)
    h2 = jnp.tanh(h2 + b2_ref[...])                              # (TB, 32) f32

    # Layer 3: Linear + Identity -> raw logits over the real action columns.
    logits = jnp.dot(h2.astype(mm_dtype), w3_ref[...],
                     preferred_element_type=jnp.float32)
    logits = logits + b3_ref[...]                                # (TB, A) f32

    # Categorical(logits=...) normalization: logits - logsumexp(logits, -1)
    m = jnp.max(logits, axis=-1, keepdims=True)
    lse = m + jnp.log(jnp.sum(jnp.exp(logits - m), axis=-1, keepdims=True))
    logp_ref[...] = (logits - lse).astype(logp_ref.dtype)


def prepare_params(params, matmul_dtype=jnp.bfloat16):
    """Cast weights to the matmul dtype; biases stay f32 (1, d_out). No padding."""
    out = []
    for w, b in params:
        out.append((w.astype(matmul_dtype),
                    b.reshape(1, -1).astype(jnp.float32)))
    return out


@functools.partial(jax.jit, static_argnames=("n_actions", "block_b"))
def categorical_policy_forward(state, prepared_params, *, n_actions,
                               block_b=1024):
    """Batch-tiled, pipelined forward.  Returns (B, n_actions) f32 log-probs."""
    (w1, b1), (w2, b2), (w3, b3) = prepared_params
    state = state.astype(jnp.float32)
    B, d_in = state.shape

    # Batch tile: multiple of 16 sublanes, no larger than the (padded) batch.
    # On a 2-TC chip (v7x) cap the tile so the grid has >= 2 parallel steps.
    n_tc = _tensorcores_per_chip()
    tb_cap = max(16, _round_up(block_b, 16))
    b16 = _round_up(B, 16)
    if n_tc > 1 and b16 >= n_tc * 16:
        tb_cap = min(tb_cap, _round_up(pl.cdiv(b16, n_tc), 16))
    tb = min(tb_cap, b16)
    b_pad = _round_up(B, tb)

    # Only pad the batch rows (feature axis stays at its real width).
    if b_pad != B:
        x = jnp.zeros((b_pad, d_in), jnp.float32).at[:B].set(state)
    else:
        x = state

    grid = (b_pad // tb,)
    batch_in_spec = pl.BlockSpec((tb, d_in), lambda i: (i, 0))
    out_spec = pl.BlockSpec((tb, n_actions), lambda i: (i, 0))

    def const_spec(arr):  # whole array, VMEM-resident across grid steps
        return pl.BlockSpec(arr.shape, lambda i: (0, 0))

    cp_kwargs = dict(dimension_semantics=("parallel",))
    if tb > 2048:
        # v5e's scoped-VMEM default (16 MiB) can bind for very large tiles.
        cp_kwargs["vmem_limit_bytes"] = 64 * 1024 * 1024

    logp_pad = pl.pallas_call(
        categorical_policy_kernel,
        out_shape=jax.ShapeDtypeStruct((b_pad, n_actions), jnp.float32),
        grid=grid,
        in_specs=[batch_in_spec,
                  const_spec(w1), const_spec(b1),
                  const_spec(w2), const_spec(b2),
                  const_spec(w3), const_spec(b3)],
        out_specs=out_spec,
        compiler_params=pltpu.CompilerParams(**cp_kwargs),
    )(x, w1, b1, w2, b2, w3, b3)

    return logp_pad[:B]


def init_linear(key, d_in, d_out):
    """PyTorch-style Linear init: U(-1/sqrt(fan_in), 1/sqrt(fan_in))."""
    kw, kb = jax.random.split(key)
    bound = 1.0 / jnp.sqrt(jnp.float32(d_in))
    w = jax.random.uniform(kw, (d_in, d_out), jnp.float32, -bound, bound)
    b = jax.random.uniform(kb, (1, d_out), jnp.float32, -bound, bound)
    return w, b


def reference_forward(state, params, matmul_dtype=jnp.bfloat16):
    """Pure-JAX reference with the same bf16-matmul / f32-epilogue recipe."""
    (w1, b1), (w2, b2), (w3, b3) = params
    x = state.astype(matmul_dtype)
    h = jnp.tanh(jnp.dot(x, w1.astype(matmul_dtype),
                         preferred_element_type=jnp.float32) + b1)
    h = jnp.tanh(jnp.dot(h.astype(matmul_dtype), w2.astype(matmul_dtype),
                         preferred_element_type=jnp.float32) + b2)
    logits = jnp.dot(h.astype(matmul_dtype), w3.astype(matmul_dtype),
                     preferred_element_type=jnp.float32) + b3
    return logits - jax.scipy.special.logsumexp(logits, axis=-1, keepdims=True)


def reference_forward_f32(state, params):
    (w1, b1), (w2, b2), (w3, b3) = params
    h = jnp.tanh(state @ w1 + b1)
    h = jnp.tanh(h @ w2 + b2)
    logits = h @ w3 + b3
    return logits - jax.scipy.special.logsumexp(logits, axis=-1, keepdims=True)


if __name__ == "__main__":
    layer_dims = [16, 32, 32, 4]     # obs_dim -> hidden -> hidden -> n_actions
    n_actions = layer_dims[-1]

    key = jax.random.PRNGKey(0)
    k_state, k_big, k1, k2, k3 = jax.random.split(key, 5)

    params = [
        init_linear(k1, layer_dims[0], layer_dims[1]),
        init_linear(k2, layer_dims[1], layer_dims[2]),
        init_linear(k3, layer_dims[2], layer_dims[3]),
    ]
    prepared_params = prepare_params(params)

    # --- small RL-acting-path batch (spec shape) ---------------------------
    state = jax.random.normal(k_state, (2, layer_dims[0]), jnp.float32)
    log_probs = categorical_policy_forward(state, prepared_params,
                                           n_actions=n_actions)
    log_probs = jax.block_until_ready(log_probs)

    ref_bf16 = reference_forward(state, params)
    ref_f32 = reference_forward_f32(state, params)
    assert log_probs.shape == (2, n_actions)
    assert jnp.allclose(log_probs, ref_bf16, atol=1e-3, rtol=1e-3)
    assert jnp.allclose(log_probs, ref_f32, atol=5e-2, rtol=5e-2)
    assert jnp.allclose(jnp.exp(log_probs).sum(axis=-1), 1.0, atol=1e-3)

    # --- larger batch to exercise the multi-step pipelined grid ------------
    big_state = jax.random.normal(k_big, (512, layer_dims[0]), jnp.float32)
    big_lp = categorical_policy_forward(big_state, prepared_params,
                                        n_actions=n_actions)
    big_lp = jax.block_until_ready(big_lp)
    assert big_lp.shape == (512, n_actions)
    assert jnp.allclose(big_lp, reference_forward(big_state, params),
                        atol=1e-3, rtol=1e-3)
    assert jnp.allclose(jnp.exp(big_lp).sum(axis=-1), 1.0, atol=1e-3)

    # TODO(synk): get_action()'s .sample()/.item() is host-side RNG sampling
    # on the Categorical distribution, not part of the tensor forward pass,
    # so it is intentionally left outside the kernel.
    print("KERNEL_OK")
</pallas_src>

<mosaic_0001>
module attributes {stable_mosaic.version = 11 : i64} {
  func.func @categorical_policy_kernel(%arg0: i32, %arg1: memref<16x16xf32, #tpu.memory_space<vmem>>, %arg2: memref<16x32xbf16, #tpu.memory_space<vmem>>, %arg3: memref<1x32xf32, #tpu.memory_space<vmem>>, %arg4: memref<32x32xbf16, #tpu.memory_space<vmem>>, %arg5: memref<1x32xf32, #tpu.memory_space<vmem>>, %arg6: memref<32x4xbf16, #tpu.memory_space<vmem>>, %arg7: memref<1x4xf32, #tpu.memory_space<vmem>>, %arg8: memref<16x4xf32, #tpu.memory_space<vmem>>) attributes {dimension_semantics = [#tpu.dimension_semantics<parallel>], iteration_bounds = array<i64: 1>, scalar_prefetch = 0 : i64, scratch_operands = 0 : i64, tpu.core_type = #tpu.core_type<tc>, window_params = [{transform_indices = @transform_0, window_bounds = array<i64: 16, 16>}, {pipeline_mode = #tpu.pipeline_mode<synchronous>, transform_indices = @transform_1, window_bounds = array<i64: 16, 32>}, {pipeline_mode = #tpu.pipeline_mode<synchronous>, transform_indices = @transform_2, window_bounds = array<i64: 1, 32>}, {pipeline_mode = #tpu.pipeline_mode<synchronous>, transform_indices = @transform_3, window_bounds = array<i64: 32, 32>}, {pipeline_mode = #tpu.pipeline_mode<synchronous>, transform_indices = @transform_4, window_bounds = array<i64: 1, 32>}, {pipeline_mode = #tpu.pipeline_mode<synchronous>, transform_indices = @transform_5, window_bounds = array<i64: 32, 4>}, {pipeline_mode = #tpu.pipeline_mode<synchronous>, transform_indices = @transform_6, window_bounds = array<i64: 1, 4>}, {transform_indices = @transform_7, window_bounds = array<i64: 16, 4>}]} {
    %c0 = arith.constant 0 : index
    %c0_0 = arith.constant 0 : index
    %0 = vector.load %arg1[%c0, %c0_0] : memref<16x16xf32, #tpu.memory_space<vmem>>, vector<16x16xf32>
    %1 = arith.truncf %0 : vector<16x16xf32> to vector<16x16xbf16>
    %c0_1 = arith.constant 0 : index
    %c0_2 = arith.constant 0 : index
    %2 = vector.load %arg2[%c0_1, %c0_2] : memref<16x32xbf16, #tpu.memory_space<vmem>>, vector<16x32xbf16>
    %cst = arith.constant dense<0.000000e+00> : vector<16x32xf32>
    %3 = tpu.matmul %1, %2, %cst {dimension_numbers = #tpu.dot_dimension_numbers<[1], [0], [0], [1], [0, 0, 1, 1], [], []>} : vector<16x16xbf16>, vector<16x32xbf16>, vector<16x32xf32> -> vector<16x32xf32>
    %c0_3 = arith.constant 0 : index
    %c0_4 = arith.constant 0 : index
    %4 = vector.load %arg3[%c0_3, %c0_4] : memref<1x32xf32, #tpu.memory_space<vmem>>, vector<1x32xf32>
    %5 = vector.broadcast %4 : vector<1x32xf32> to vector<16x32xf32>
    %6 = arith.addf %3, %5 : vector<16x32xf32>
    %7 = math.tanh %6 : vector<16x32xf32>
    %8 = arith.truncf %7 : vector<16x32xf32> to vector<16x32xbf16>
    %c0_5 = arith.constant 0 : index
    %c0_6 = arith.constant 0 : index
    %9 = vector.load %arg4[%c0_5, %c0_6] : memref<32x32xbf16, #tpu.memory_space<vmem>>, vector<32x32xbf16>
    %cst_7 = arith.constant dense<0.000000e+00> : vector<16x32xf32>
    %10 = tpu.matmul %8, %9, %cst_7 {dimension_numbers = #tpu.dot_dimension_numbers<[1], [0], [0], [1], [0, 0, 1, 1], [], []>} : vector<16x32xbf16>, vector<32x32xbf16>, vector<16x32xf32> -> vector<16x32xf32>
    %c0_8 = arith.constant 0 : index
    %c0_9 = arith.constant 0 : index
    %11 = vector.load %arg5[%c0_8, %c0_9] : memref<1x32xf32, #tpu.memory_space<vmem>>, vector<1x32xf32>
    %12 = vector.broadcast %11 : vector<1x32xf32> to vector<16x32xf32>
    %13 = arith.addf %10, %12 : vector<16x32xf32>
    %14 = math.tanh %13 : vector<16x32xf32>
    %15 = arith.truncf %14 : vector<16x32xf32> to vector<16x32xbf16>
    %c0_10 = arith.constant 0 : index
    %c0_11 = arith.constant 0 : index
    %16 = vector.load %arg6[%c0_10, %c0_11] : memref<32x4xbf16, #tpu.memory_space<vmem>>, vector<32x4xbf16>
    %cst_12 = arith.constant dense<0.000000e+00> : vector<16x4xf32>
    %17 = tpu.matmul %15, %16, %cst_12 {dimension_numbers = #tpu.dot_dimension_numbers<[1], [0], [0], [1], [0, 0, 1, 1], [], []>} : vector<16x32xbf16>, vector<32x4xbf16>, vector<16x4xf32> -> vector<16x4xf32>
    %c0_13 = arith.constant 0 : index
    %c0_14 = arith.constant 0 : index
    %18 = vector.load %arg7[%c0_13, %c0_14] : memref<1x4xf32, #tpu.memory_space<vmem>>, vector<1x4xf32>
    %19 = vector.broadcast %18 : vector<1x4xf32> to vector<16x4xf32>
    %20 = arith.addf %17, %19 : vector<16x4xf32>
    %cst_15 = arith.constant dense<0xFF800000> : vector<16xf32>
    %21 = vector.multi_reduction <maximumf>, %20, %cst_15 [1] : vector<16x4xf32> to vector<16xf32>
    %22 = vector.shape_cast %21 : vector<16xf32> to vector<16x1xf32>
    %23 = vector.broadcast %22 : vector<16x1xf32> to vector<16x4xf32>
    %24 = arith.subf %20, %23 : vector<16x4xf32>
    %25 = math.exp %24 : vector<16x4xf32>
    %cst_16 = arith.constant dense<0.000000e+00> : vector<16xf32>
    %26 = vector.multi_reduction <add>, %25, %cst_16 [1] : vector<16x4xf32> to vector<16xf32>
    %27 = vector.shape_cast %26 : vector<16xf32> to vector<16x1xf32>
    %28 = math.log %27 : vector<16x1xf32>
    %29 = arith.addf %22, %28 : vector<16x1xf32>
    %30 = vector.broadcast %29 : vector<16x1xf32> to vector<16x4xf32>
    %31 = arith.subf %20, %30 : vector<16x4xf32>
    %c0_17 = arith.constant 0 : index
    %c0_18 = arith.constant 0 : index
    %32 = vector.load %arg8[%c0_17, %c0_18] : memref<16x4xf32, #tpu.memory_space<vmem>>, vector<16x4xf32>
    tpu.vector_store %arg8[%c0_17, %c0_18], %31 {strides = array<i32>} : memref<16x4xf32, #tpu.memory_space<vmem>>, vector<16x4xf32>,
    return
  }
  func.func @transform_0(%arg0: i32) -> (i32, i32) {
    %c0_i32 = arith.constant 0 : i32
    %c0_i32_0 = arith.constant 0 : i32
    return %arg0, %c0_i32 : i32, i32
  }
  func.func @transform_1(%arg0: i32) -> (i32, i32) {
    %c0_i32 = arith.constant 0 : i32
    %c0_i32_0 = arith.constant 0 : i32
    %c0_i32_1 = arith.constant 0 : i32
    return %c0_i32, %c0_i32_0 : i32, i32
  }
  func.func @transform_2(%arg0: i32) -> (i32, i32) {
    %c0_i32 = arith.constant 0 : i32
    %c0_i32_0 = arith.constant 0 : i32
    %c0_i32_1 = arith.constant 0 : i32
    return %c0_i32, %c0_i32_0 : i32, i32
  }
  func.func @transform_3(%arg0: i32) -> (i32, i32) {
    %c0_i32 = arith.constant 0 : i32
    %c0_i32_0 = arith.constant 0 : i32
    %c0_i32_1 = arith.constant 0 : i32
    return %c0_i32, %c0_i32_0 : i32, i32
  }
  func.func @transform_4(%arg0: i32) -> (i32, i32) {
    %c0_i32 = arith.constant 0 : i32
    %c0_i32_0 = arith.constant 0 : i32
    %c0_i32_1 = arith.constant 0 : i32
    return %c0_i32, %c0_i32_0 : i32, i32
  }
  func.func @transform_5(%arg0: i32) -> (i32, i32) {
    %c0_i32 = arith.constant 0 : i32
    %c0_i32_0 = arith.constant 0 : i32
    %c0_i32_1 = arith.constant 0 : i32
    return %c0_i32, %c0_i32_0 : i32, i32
  }
  func.func @transform_6(%arg0: i32) -> (i32, i32) {
    %c0_i32 = arith.constant 0 : i32
    %c0_i32_0 = arith.constant 0 : i32
    %c0_i32_1 = arith.constant 0 : i32
    return %c0_i32, %c0_i32_0 : i32, i32
  }
  func.func @transform_7(%arg0: i32) -> (i32, i32) {
    %c0_i32 = arith.constant 0 : i32
    %c0_i32_0 = arith.constant 0 : i32
    return %arg0, %c0_i32 : i32, i32
  }
}

</mosaic_0001>

<llo_original>
// kernel: categorical_policy_forward.1
$region0: #{categorical_policy_forward.1}
  #allocation0 [shape = 'u32[]', space=smem, size = 0x4, offset = 0x4, fixed_abs, tag = 'smem constant byte address 0x4 - core index']
  #allocation1 [shape = 'u32[144,128]{1,0:T(1,128)}', space=vmem, size = 0x12000, scoped, tag = 'internal scratch']
  %s0 = inlined_call_operand.vmem [shape: f32[16,16], index: 0, kind: input, shape index: {}]
  %s1 = inlined_call_operand.vmem [shape: bf16[16,32], index: 1, kind: input, shape index: {}]
  %s2 = inlined_call_operand.vmem [shape: f32[1,32], index: 2, kind: input, shape index: {}]
  %s3 = inlined_call_operand.vmem [shape: bf16[32,32], index: 3, kind: input, shape index: {}]
  %s4 = inlined_call_operand.vmem [shape: f32[1,32], index: 4, kind: input, shape index: {}]
  %s5 = inlined_call_operand.vmem [shape: bf16[32,4], index: 5, kind: input, shape index: {}]
  %s6 = inlined_call_operand.vmem [shape: f32[1,4], index: 6, kind: input, shape index: {}]
  %s7 = inlined_call_operand.vmem [shape: f32[16,4], index: 7, kind: output, shape index: {}]
  %s8 = sld [smem:[#allocation0]]
  $region38: #{categorical_policy_forward.1} parent=0
    _
  %s10 = ssub.s32 1, %s8
  %s11 = scalar_select 0, %s10, %s8
  // Predicated region
  $region2: #{categorical_policy_forward.1} parent=0 // pred_check
    _
  $region3: #{categorical_policy_forward.1} parent=0 // pred_check_branch
    %13 = sbr.rel (0) target = $region5
  $region4: #{categorical_policy_forward.1} parent=0 // pred_region
    _
  $region5: #{categorical_policy_forward.1} parent=0 // pred_fallthru
    _
  // Predicated region
  $region6: #{categorical_policy_forward.1} parent=0 // pred_check
    _
  $region7: #{categorical_policy_forward.1} parent=0 // pred_check_branch
    %15 = sbr.rel (0) target = $region9
  $region8: #{categorical_policy_forward.1} parent=0 // pred_region
    _
  $region9: #{categorical_policy_forward.1} parent=0 // pred_fallthru
    _
  // Predicated region
  $region10: #{categorical_policy_forward.1} parent=0 // pred_check
    _
  $region11: #{categorical_policy_forward.1} parent=0 // pred_check_branch
    %17 = sbr.rel (0) target = $region13
  $region12: #{categorical_policy_forward.1} parent=0 // pred_region
    _
  $region13: #{categorical_policy_forward.1} parent=0 // pred_fallthru
    _
  // Predicated region
  $region14: #{categorical_policy_forward.1} parent=0 // pred_check
    _
  $region15: #{categorical_policy_forward.1} parent=0 // pred_check_branch
    %19 = sbr.rel (0) target = $region17
  $region16: #{categorical_policy_forward.1} parent=0 // pred_region
    _
  $region17: #{categorical_policy_forward.1} parent=0 // pred_fallthru
    _
  // Predicated region
  $region18: #{categorical_policy_forward.1} parent=0 // pred_check
    _
  $region19: #{categorical_policy_forward.1} parent=0 // pred_check_branch
    %21 = sbr.rel (0) target = $region21
  $region20: #{categorical_policy_forward.1} parent=0 // pred_region
    _
  $region21: #{categorical_policy_forward.1} parent=0 // pred_fallthru
    _
  // Predicated region
  $region22: #{categorical_policy_forward.1} parent=0 // pred_check
    _
  $region23: #{categorical_policy_forward.1} parent=0 // pred_check_branch
    %23 = sbr.rel (0) target = $region25
  $region24: #{categorical_policy_forward.1} parent=0 // pred_region
    _
  $region25: #{categorical_policy_forward.1} parent=0 // pred_fallthru
    _
  // Predicated region
  $region26: #{categorical_policy_forward.1} parent=0 // pred_check
    _
  $region27: #{categorical_policy_forward.1} parent=0 // pred_check_branch
    %25 = sbr.rel (0) target = $region29
  $region28: #{categorical_policy_forward.1} parent=0 // pred_region
    _
  $region29: #{categorical_policy_forward.1} parent=0 // pred_fallthru
    _
  %v27 = vld [vmem:[%s0] sm:$0xff]
  %v28 = vld [vmem:[%s0 + $0x8] sm:$0xff]
  %v29 = vpack.c.bf16 %v28, %v27
  %v30 = vld [vmem:[%s1] sm:$0xf]
  %v31 = vld [vmem:[%s1 + $0x4] sm:$0xf]
  %v32 = vld [vmem:[%s2] sm:$0x1]
  %v34 = vlaneseq
  %v35 = vshrl.u32 %v34, 7
  %v36 = vsub.s32 0, %v35
  %v37 = vrot.slane %v32, %v36
  %v41 = vunpack.c.l.b16 %v30
  %v42 = vunpack.c.l.b16 %v31
  %v43 = vpack.c.b16 %v42, %v41
  %vm45 = vcmask 130048
  %v47 = vsel %vm45, %v29, 0
  %49 = vmatprep.subr.bf16.mxu0 0
  %50 = vmatpush1.bf16.msra.mxu0 0
  %51 = vmatprep.subr.bf16.mxu0 0
  %52 = vmatpush1.bf16.msra.mxu0 0
  %53 = vmatprep.subr.bf16.mxu0 0
  %54 = vmatpush1.bf16.msra.mxu0 0
  %55 = vmatprep.subr.bf16.mxu0 0
  %56 = vmatpush1.bf16.msra.mxu0 0
  %57 = vmatprep.subr.bf16.mxu0 0
  %58 = vmatpush1.bf16.msra.mxu0 0
  %59 = vmatprep.subr.bf16.mxu0 0
  %60 = vmatpush1.bf16.msra.mxu0 0
  %61 = vmatprep.subr.bf16.mxu0 0
  %62 = vmatpush1.bf16.msra.mxu0 0
  %63 = vmatprep.subr.bf16.mxu0 0
  %64 = vmatpush1.bf16.msra.mxu0 %v43
  %65 = vmatprep.subr.bf16.mxu0 0
  %66 = vmatpush2.bf16.msra.mxu0 0
  %67 = vmatprep.subr.bf16.mxu0 0
  %68 = vmatpush2.bf16.msra.mxu0 0
  %69 = vmatprep.subr.bf16.mxu0 0
  %70 = vmatpush2.bf16.msra.mxu0 0
  %71 = vmatprep.subr.bf16.mxu0 0
  %72 = vmatpush2.bf16.msra.mxu0 0
  %73 = vmatprep.subr.bf16.mxu0 0
  %74 = vmatpush2.bf16.msra.mxu0 0
  %75 = vmatprep.subr.bf16.mxu0 0
  %76 = vmatpush2.bf16.msra.mxu0 0
  %77 = vmatprep.subr.bf16.mxu0 0
  %78 = vmatpush2.bf16.msra.mxu0 0
  %79 = vmatprep.subr.bf16.mxu0 0
  %80 = vmatpush2.bf16.msra.mxu0 0
  %81 = vmatprep.mubr.bf16.mxu0 0
  %82 = vmatmul.mubr.bf16.gmra.mxu0 %v47
  %v83 = vpop.f32.mrf.mxu0
  %v84 = vadd.f32 %v37, %v83
  %v85 = vpop.f32.mrf.mxu0
  %v86 = vpop.f32.mrf.mxu0
  %v87 = vadd.f32 %v37, %v86
  %v88 = vpop.f32.mrf.mxu0
  %89 = vdwg.mxu0
  %v90 = vtanh.pop %v84
  %v91 = vtanh.pop %v87
  %v92 = vpack.c.bf16 %v91, %v90
  %v93 = vld [vmem:[%s3] sm:$0xf]
  %v94 = vld [vmem:[%s3 + $0x4] sm:$0xf]
  %v95 = vld [vmem:[%s3 + $0x8] sm:$0xf]
  %v96 = vld [vmem:[%s3 + $0xc] sm:$0xf]
  %v97 = vld [vmem:[%s4] sm:$0x1]
  %v99 = vlaneseq
  %v100 = vshrl.u32 %v99, 7
  %v101 = vsub.s32 0, %v100
  %v102 = vrot.slane %v97, %v101
  %v108 = vunpack.c.l.b16 %v93
  %v109 = vunpack.c.l.b16 %v94
  %v110 = vunpack.c.l.b16 %v95
  %v111 = vunpack.c.l.b16 %v96
  %v112 = vpack.c.b16 %v109, %v108
  %v113 = vpack.c.b16 %v111, %v110
  %vm116 = vcmask 261120
  %v118 = vsel %vm116, %v92, 0
  %120 = vmatprep.subr.bf16.mxu0 0
  %121 = vmatpush1.bf16.msra.mxu0 0
  %122 = vmatprep.subr.bf16.mxu0 0
  %123 = vmatpush1.bf16.msra.mxu0 0
  %124 = vmatprep.subr.bf16.mxu0 0
  %125 = vmatpush1.bf16.msra.mxu0 0
  %126 = vmatprep.subr.bf16.mxu0 0
  %127 = vmatpush1.bf16.msra.mxu0 0
  %128 = vmatprep.subr.bf16.mxu0 0
  %129 = vmatpush1.bf16.msra.mxu0 0
  %130 = vmatprep.subr.bf16.mxu0 0
  %131 = vmatpush1.bf16.msra.mxu0 0
  %132 = vmatprep.subr.bf16.mxu0 0
  %133 = vmatpush1.bf16.msra.mxu0 %v113
  %134 = vmatprep.subr.bf16.mxu0 0
  %135 = vmatpush1.bf16.msra.mxu0 %v112
  %136 = vmatprep.subr.bf16.mxu0 0
  %137 = vmatpush2.bf16.msra.mxu0 0
  %138 = vmatprep.subr.bf16.mxu0 0
  %139 = vmatpush2.bf16.msra.mxu0 0
  %140 = vmatprep.subr.bf16.mxu0 0
  %141 = vmatpush2.bf16.msra.mxu0 0
  %142 = vmatprep.subr.bf16.mxu0 0
  %143 = vmatpush2.bf16.msra.mxu0 0
  %144 = vmatprep.subr.bf16.mxu0 0
  %145 = vmatpush2.bf16.msra.mxu0 0
  %146 = vmatprep.subr.bf16.mxu0 0
  %147 = vmatpush2.bf16.msra.mxu0 0
  %148 = vmatprep.subr.bf16.mxu0 0
  %149 = vmatpush2.bf16.msra.mxu0 0
  %150 = vmatprep.subr.bf16.mxu0 0
  %151 = vmatpush2.bf16.msra.mxu0 0
  %152 = vmatprep.mubr.bf16.mxu0 0
  %153 = vmatmul.mubr.bf16.gmra.mxu0 %v118
  %v154 = vpop.f32.mrf.mxu0
  %v155 = vadd.f32 %v102, %v154
  %v156 = vpop.f32.mrf.mxu0
  %v157 = vpop.f32.mrf.mxu0
  %v158 = vadd.f32 %v102, %v157
  %v159 = vpop.f32.mrf.mxu0
  %160 = vdwg.mxu0
  %v161 = vtanh.pop %v155
  %v162 = vtanh.pop %v158
  %v163 = vpack.c.bf16 %v162, %v161
  %v164 = vld [vmem:[%s5] sm:$0xf]
  %v165 = vld [vmem:[%s5 + $0x4] sm:$0xf]
  %v166 = vld [vmem:[%s5 + $0x8] sm:$0xf]
  %v167 = vld [vmem:[%s5 + $0xc] sm:$0xf]
  %v168 = vld [vmem:[%s6] sm:$0x1]
  %v170 = vlaneseq
  %v171 = vshrl.u32 %v170, 7
  %v172 = vsub.s32 0, %v171
  %v173 = vrot.slane %v168, %v172
  %v179 = vunpack.c.l.b16 %v164
  %v180 = vunpack.c.l.b16 %v165
  %v181 = vunpack.c.l.b16 %v166
  %v182 = vunpack.c.l.b16 %v167
  %v183 = vpack.c.b16 %v180, %v179
  %v184 = vpack.c.b16 %v182, %v181
  %v188 = vsel %vm116, %v163, 0
  %190 = vmatprep.subr.bf16.mxu0 0
  %191 = vmatpush1.bf16.msra.mxu0 0
  %192 = vmatprep.subr.bf16.mxu0 0
  %193 = vmatpush1.bf16.msra.mxu0 0
  %194 = vmatprep.subr.bf16.mxu0 0
  %195 = vmatpush1.bf16.msra.mxu0 0
  %196 = vmatprep.subr.bf16.mxu0 0
  %197 = vmatpush1.bf16.msra.mxu0 0
  %198 = vmatprep.subr.bf16.mxu0 0
  %199 = vmatpush1.bf16.msra.mxu0 0
  %200 = vmatprep.subr.bf16.mxu0 0
  %201 = vmatpush1.bf16.msra.mxu0 0
  %202 = vmatprep.subr.bf16.mxu0 0
  %203 = vmatpush1.bf16.msra.mxu0 %v184
  %204 = vmatprep.subr.bf16.mxu0 0
  %205 = vmatpush1.bf16.msra.mxu0 %v183
  %206 = vmatprep.subr.bf16.mxu0 0
  %207 = vmatpush2.bf16.msra.mxu0 0
  %208 = vmatprep.subr.bf16.mxu0 0
  %209 = vmatpush2.bf16.msra.mxu0 0
  %210 = vmatprep.subr.bf16.mxu0 0
  %211 = vmatpush2.bf16.msra.mxu0 0
  %212 = vmatprep.subr.bf16.mxu0 0
  %213 = vmatpush2.bf16.msra.mxu0 0
  %214 = vmatprep.subr.bf16.mxu0 0
  %215 = vmatpush2.bf16.msra.mxu0 0
  %216 = vmatprep.subr.bf16.mxu0 0
  %217 = vmatpush2.bf16.msra.mxu0 0
  %218 = vmatprep.subr.bf16.mxu0 0
  %219 = vmatpush2.bf16.msra.mxu0 0
  %220 = vmatprep.subr.bf16.mxu0 0
  %221 = vmatpush2.bf16.msra.mxu0 0
  %222 = vmatprep.mubr.bf16.mxu0 0
  %223 = vmatmul.mubr.bf16.gmra.mxu0 %v188
  %v224 = vpop.f32.mrf.mxu0
  %v225 = vadd.f32 %v173, %v224
  %v226 = vpop.f32.mrf.mxu0
  %v227 = vpop.f32.mrf.mxu0
  %v228 = vadd.f32 %v173, %v227
  %v229 = vpop.f32.mrf.mxu0
  %230 = vdwg.mxu0
  %vm231 = vcmask 31744
  %v232 = vsel %vm231, %v225, -inf
  %233 = vmax.xlane.f32.xlu0 %v232
  %v234 = vpop.xlane.xlu0 %233
  %v235 = vsel %vm231, %v228, -inf
  %236 = vmax.xlane.f32.xlu0 %v235
  %v237 = vpop.xlane.xlu0 %236
  %v238 = vsub.f32 %v225, %v234
  %v239 = vsub.f32 %v228, %v237
  %v240 = vmul.f32 %v238, 1.442695
  %v241 = vpow.pop %v240
  %v242 = vmul.f32 %v239, 1.442695
  %v243 = vpow.pop %v242
  %v244 = vsel %vm231, %v241, 0.0
  %245 = vadd.xlane.f32.xlu0 %v244
  %v246 = vpop.xlane.xlu0 %245
  %v247 = vsel %vm231, %v243, 0.0
  %248 = vadd.xlane.f32.xlu0 %v247
  %v249 = vpop.xlane.xlu0 %248
  %v250 = vlog2.pop %v246
  %v251 = vmul.f32 %v250, 0.6931472
  %v252 = vlog2.pop %v249
  %v253 = vmul.f32 %v252, 0.6931472
  %v254 = vadd.f32 %v234, %v251
  %v255 = vadd.f32 %v237, %v253
  %v256 = vsub.f32 %v225, %v254
  %v257 = vsub.f32 %v228, %v255
  %258 = vst.msk [vmem:[%s7] sm:$0xff] %vm231, %v256
  %259 = vst.msk [vmem:[%s7 + $0x8] sm:$0xff] %vm231, %v257
  // Predicated region
  $region30: #{categorical_policy_forward.1} parent=0 // pred_check
    _
  $region31: #{categorical_policy_forward.1} parent=0 // pred_check_branch
    %261 = sbr.rel (0) target = $region33
  $region32: #{categorical_policy_forward.1} parent=0 // pred_region
    _
  $region33: #{categorical_policy_forward.1} parent=0 // pred_fallthru
    _
  // Predicated region
  $region34: #{categorical_policy_forward.1} parent=0 // pred_check
    _
  $region35: #{categorical_policy_forward.1} parent=0 // pred_check_branch
    %263 = sbr.rel (0) target = $region37
  $region36: #{categorical_policy_forward.1} parent=0 // pred_region
    _
  $region37: #{categorical_policy_forward.1} parent=0 // pred_fallthru
    _

</llo_original>
